<compile_context>
chip_gen: v7x
topology: tpu7x:2x2x1
jax: 0.10.0
libtpu: 0.0.40
codegen_flags: <defaults>
</compile_context>

<pallas_src>
import random

import jax
import jax.numpy as jnp
from jax.experimental import pallas as pl
from jax.experimental.pallas import tpu as pltpu

LANE = 128      # TPU lane width (last dim)
SUBLANE = 8     # TPU sublane width (second-to-last dim, f32)


def _round_up(x, m):
    return (x + m - 1) // m * m


def _pad_to(a, shape):
    pads = [(0, s - d) for d, s in zip(a.shape, shape)]
    return jnp.pad(a, pads)


def make_dynamic_net_kernel(n_mid):
    """Kernel specialized on the (host-known) number of middle-layer repeats."""

    def kernel(x_ref, w_in_ref, b_in_ref, w_mid_ref, b_mid_ref,
               w_out_ref, b_out_ref, y_ref):
        tile_n = x_ref.shape[0]
        h_p = w_in_ref.shape[1]
        d_out_p = w_out_ref.shape[1]

        # Hoisted f32 bias broadcasts (reused; JAX does not CSE broadcast_in_dim).
        b_in = jnp.broadcast_to(b_in_ref[...], (tile_n, h_p))
        b_out = jnp.broadcast_to(b_out_ref[...], (tile_n, d_out_p))

        # h_relu = input_layer(x).clamp(min=0)   -- bf16 MXU operands, f32 accumulate
        h = jnp.dot(x_ref[...].astype(jnp.bfloat16), w_in_ref[...],
                    preferred_element_type=jnp.float32)
        h = jnp.maximum(h + b_in, 0.0)

        # for _ in range(n_mid): h_relu = middle_layer(h_relu).clamp(min=0)
        # n_mid is a static Python int -> fully unrolled; weight/bias read once.
        if n_mid:
            w_mid = w_mid_ref[...]
            b_mid = jnp.broadcast_to(b_mid_ref[...], (tile_n, h_p))
            for _ in range(n_mid):
                h = jnp.dot(h.astype(jnp.bfloat16), w_mid,
                            preferred_element_type=jnp.float32)
                h = jnp.maximum(h + b_mid, 0.0)

        # y_pred = output_layer(h_relu)
        y = jnp.dot(h.astype(jnp.bfloat16), w_out_ref[...],
                    preferred_element_type=jnp.float32)
        y_ref[...] = y + b_out

    return kernel


def init_params(key, d_in, h, d_out):
    """Deterministic init mimicking nn.Linear (uniform +-1/sqrt(fan_in)), f32."""
    ks = jax.random.split(key, 6)

    def linear(kw, kb, fan_in, fan_out):
        bound = 1.0 / jnp.sqrt(jnp.float32(fan_in))
        w = jax.random.uniform(kw, (fan_in, fan_out), jnp.float32, -bound, bound)
        b = jax.random.uniform(kb, (1, fan_out), jnp.float32, -bound, bound)
        return w, b

    w_in, b_in = linear(ks[0], ks[1], d_in, h)
    w_mid, b_mid = linear(ks[2], ks[3], h, h)
    w_out, b_out = linear(ks[4], ks[5], h, d_out)
    return dict(w_in=w_in, b_in=b_in, w_mid=w_mid, b_mid=b_mid,
                w_out=w_out, b_out=b_out)


def pad_params(params):
    """Lane-pad feature *output* dims, keep w_in's true K rows; weights -> bf16.

    Done once, outside the hot path. Zero columns + zero biases keep padded lanes
    exactly 0 through ReLU, so padding is numerically inert.
    """
    d_in, h = params["w_in"].shape
    _, d_out = params["w_out"].shape
    h_p = _round_up(h, LANE)
    d_out_p = _round_up(d_out, LANE)
    return dict(
        w_in=_pad_to(params["w_in"], (d_in, h_p)).astype(jnp.bfloat16),
        b_in=_pad_to(params["b_in"], (1, h_p)),                      # f32
        w_mid=_pad_to(params["w_mid"], (h_p, h_p)).astype(jnp.bfloat16),
        b_mid=_pad_to(params["b_mid"], (1, h_p)),                    # f32
        w_out=_pad_to(params["w_out"], (h_p, d_out_p)).astype(jnp.bfloat16),
        b_out=_pad_to(params["b_out"], (1, d_out_p)),                # f32
    )


def choose_tile_n(n, cap=512):
    """>=2 grid steps whenever N allows (v7x: both TCs busy); cap 512 (HBM roofline)."""
    return min(cap, _round_up(pl.cdiv(n, 2), SUBLANE))


def pad_batch(x, tile_n):
    """Batch-pad x once, outside the hot path."""
    n = x.shape[0]
    n_pad = _round_up(n, tile_n)
    if n_pad == n:
        return x
    return jnp.pad(x, ((0, n_pad - n), (0, 0)))


def dynamic_net_forward(x_padded, padded_params, n_mid, tile_n):
    """x_padded: [n_pad, D_In] f32 (n_pad % tile_n == 0). Returns padded [n_pad, d_out_p]."""
    n_pad, d_in = x_padded.shape
    _, h_p = padded_params["w_in"].shape
    _, d_out_p = padded_params["w_out"].shape
    assert n_pad % tile_n == 0

    def run(single_buffer_weights):
        if single_buffer_weights:
            # Constant-index blocks never change -> single-buffer them to halve
            # their VMEM footprint (v7x has only 64 MiB/TC).
            def const_spec(shape):
                return pl.BlockSpec(shape, lambda i: (0, 0),
                                    pipeline_mode=pl.Buffered(1))
        else:
            def const_spec(shape):
                return pl.BlockSpec(shape, lambda i: (0, 0))

        call = pl.pallas_call(
            make_dynamic_net_kernel(n_mid),
            out_shape=jax.ShapeDtypeStruct((n_pad, d_out_p), jnp.float32),
            grid=(n_pad // tile_n,),
            in_specs=[
                pl.BlockSpec((tile_n, d_in), lambda i: (i, 0)),  # x tile, true D_In (no K pad)
                const_spec((d_in, h_p)),                         # w_in  (bf16)
                const_spec((1, h_p)),                            # b_in  (f32)
                const_spec((h_p, h_p)),                          # w_mid (bf16)
                const_spec((1, h_p)),                            # b_mid (f32)
                const_spec((h_p, d_out_p)),                      # w_out (bf16)
                const_spec((1, d_out_p)),                        # b_out (f32)
            ],
            out_specs=pl.BlockSpec((tile_n, d_out_p), lambda i: (i, 0)),
            compiler_params=pltpu.CompilerParams(
                dimension_semantics=("parallel",),               # megacore split on v7x
                vmem_limit_bytes=48 * 1024 * 1024,               # explicit budget, headroom on v7x
            ),
        )
        return call(x_padded,
                    padded_params["w_in"], padded_params["b_in"],
                    padded_params["w_mid"], padded_params["b_mid"],
                    padded_params["w_out"], padded_params["b_out"])

    try:
        return run(True)
    except Exception:
        # This jax build rejects pl.Buffered(1); fall back to default double-buffering
        # (correctness identical, slightly higher VMEM footprint).
        return run(False)


def reference_forward(x, params, n_mid):
    """Pure-JAX reference using the same bf16-operand / f32-accumulate matmuls."""
    def mm(a, w):
        return jnp.dot(a.astype(jnp.bfloat16), w.astype(jnp.bfloat16),
                       preferred_element_type=jnp.float32)

    h = jnp.maximum(mm(x, params["w_in"]) + params["b_in"], 0.0)
    for _ in range(n_mid):
        h = jnp.maximum(mm(h, params["w_mid"]) + params["b_mid"], 0.0)
    return mm(h, params["w_out"]) + params["b_out"]


if __name__ == "__main__":
    # Small shapes consistent with the module: N x D_In input, hidden H, output D_Out.
    N, D_IN, H, D_OUT = 8, 32, 64, 16

    key = jax.random.PRNGKey(0)
    kx, kp = jax.random.split(key)
    x = jax.random.normal(kx, (N, D_IN), jnp.float32)

    params = init_params(kp, D_IN, H, D_OUT)
    padded_params = pad_params(params)        # pad + bf16-cast weights once (outside hot path)

    # Deterministic draw of the dynamic repeat count (mirrors random.randint(0, 3),
    # resolved host-side at trace time exactly like the PyTorch forward).
    random.seed(0)
    n_mid = random.randint(0, 3)

    tile_n = choose_tile_n(N)
    x_padded = pad_batch(x, tile_n)           # batch-pad once (outside hot path)

    y_padded = dynamic_net_forward(x_padded, padded_params, n_mid, tile_n)
    y_padded = jax.block_until_ready(y_padded)
    y = y_padded[:N, :D_OUT]                  # slice in the consumer, not per-call

    y_ref = reference_forward(x, params, n_mid)
    assert y.shape == (N, D_OUT)
    # bf16 MXU operands -> tolerance loosened vs the old f32-exact check.
    assert jnp.allclose(y, y_ref, atol=5e-2, rtol=5e-2), \
        float(jnp.max(jnp.abs(y - y_ref)))

    print("KERNEL_OK")
</pallas_src>

<mosaic_0001>
module attributes {stable_mosaic.version = 11 : i64} {
  func.func @kernel(%arg0: i32, %arg1: memref<8x32xf32, #tpu.memory_space<vmem>>, %arg2: memref<32x128xbf16, #tpu.memory_space<vmem>>, %arg3: memref<1x128xf32, #tpu.memory_space<vmem>>, %arg4: memref<128x128xbf16, #tpu.memory_space<vmem>>, %arg5: memref<1x128xf32, #tpu.memory_space<vmem>>, %arg6: memref<128x128xbf16, #tpu.memory_space<vmem>>, %arg7: memref<1x128xf32, #tpu.memory_space<vmem>>, %arg8: memref<8x128xf32, #tpu.memory_space<vmem>>) attributes {dimension_semantics = [#tpu.dimension_semantics<parallel>], iteration_bounds = array<i64: 1>, scalar_prefetch = 0 : i64, scratch_operands = 0 : i64, tpu.core_type = #tpu.core_type<tc>, window_params = [{transform_indices = @transform_0, window_bounds = array<i64: 8, 32>}, {pipeline_mode = #tpu.pipeline_mode<synchronous>, transform_indices = @transform_1, window_bounds = array<i64: 32, 128>}, {pipeline_mode = #tpu.pipeline_mode<synchronous>, transform_indices = @transform_2, window_bounds = array<i64: 1, 128>}, {pipeline_mode = #tpu.pipeline_mode<synchronous>, transform_indices = @transform_3, window_bounds = array<i64: 128, 128>}, {pipeline_mode = #tpu.pipeline_mode<synchronous>, transform_indices = @transform_4, window_bounds = array<i64: 1, 128>}, {pipeline_mode = #tpu.pipeline_mode<synchronous>, transform_indices = @transform_5, window_bounds = array<i64: 128, 128>}, {pipeline_mode = #tpu.pipeline_mode<synchronous>, transform_indices = @transform_6, window_bounds = array<i64: 1, 128>}, {transform_indices = @transform_7, window_bounds = array<i64: 8, 128>}]} {
    %c0 = arith.constant 0 : index
    %c0_0 = arith.constant 0 : index
    %0 = vector.load %arg3[%c0, %c0_0] : memref<1x128xf32, #tpu.memory_space<vmem>>, vector<1x128xf32>
    %1 = vector.shape_cast %0 : vector<1x128xf32> to vector<1x128xf32>
    %2 = vector.broadcast %1 : vector<1x128xf32> to vector<8x128xf32>
    %c0_1 = arith.constant 0 : index
    %c0_2 = arith.constant 0 : index
    %3 = vector.load %arg7[%c0_1, %c0_2] : memref<1x128xf32, #tpu.memory_space<vmem>>, vector<1x128xf32>
    %4 = vector.shape_cast %3 : vector<1x128xf32> to vector<1x128xf32>
    %5 = vector.broadcast %4 : vector<1x128xf32> to vector<8x128xf32>
    %c0_3 = arith.constant 0 : index
    %c0_4 = arith.constant 0 : index
    %6 = vector.load %arg1[%c0_3, %c0_4] : memref<8x32xf32, #tpu.memory_space<vmem>>, vector<8x32xf32>
    %7 = arith.truncf %6 : vector<8x32xf32> to vector<8x32xbf16>
    %c0_5 = arith.constant 0 : index
    %c0_6 = arith.constant 0 : index
    %8 = vector.load %arg2[%c0_5, %c0_6] : memref<32x128xbf16, #tpu.memory_space<vmem>>, vector<32x128xbf16>
    %cst = arith.constant dense<0.000000e+00> : vector<8x128xf32>
    %9 = tpu.matmul %7, %8, %cst {dimension_numbers = #tpu.dot_dimension_numbers<[1], [0], [0], [1], [0, 0, 1, 1], [], []>} : vector<8x32xbf16>, vector<32x128xbf16>, vector<8x128xf32> -> vector<8x128xf32>
    %10 = arith.addf %9, %2 : vector<8x128xf32>
    %cst_7 = arith.constant 0.000000e+00 : f32
    %11 = vector.broadcast %cst_7 : f32 to vector<8x128xf32>
    %12 = arith.maximumf %10, %11 : vector<8x128xf32>
    %c0_8 = arith.constant 0 : index
    %c0_9 = arith.constant 0 : index
    %13 = vector.load %arg4[%c0_8, %c0_9] : memref<128x128xbf16, #tpu.memory_space<vmem>>, vector<128x128xbf16>
    %c0_10 = arith.constant 0 : index
    %c0_11 = arith.constant 0 : index
    %14 = vector.load %arg5[%c0_10, %c0_11] : memref<1x128xf32, #tpu.memory_space<vmem>>, vector<1x128xf32>
    %15 = vector.shape_cast %14 : vector<1x128xf32> to vector<1x128xf32>
    %16 = vector.broadcast %15 : vector<1x128xf32> to vector<8x128xf32>
    %17 = arith.truncf %12 : vector<8x128xf32> to vector<8x128xbf16>
    %cst_12 = arith.constant dense<0.000000e+00> : vector<8x128xf32>
    %18 = tpu.matmul %17, %13, %cst_12 {dimension_numbers = #tpu.dot_dimension_numbers<[1], [0], [0], [1], [0, 0, 1, 1], [], []>} : vector<8x128xbf16>, vector<128x128xbf16>, vector<8x128xf32> -> vector<8x128xf32>
    %19 = arith.addf %18, %16 : vector<8x128xf32>
    %cst_13 = arith.constant 0.000000e+00 : f32
    %20 = vector.broadcast %cst_13 : f32 to vector<8x128xf32>
    %21 = arith.maximumf %19, %20 : vector<8x128xf32>
    %22 = arith.truncf %21 : vector<8x128xf32> to vector<8x128xbf16>
    %cst_14 = arith.constant dense<0.000000e+00> : vector<8x128xf32>
    %23 = tpu.matmul %22, %13, %cst_14 {dimension_numbers = #tpu.dot_dimension_numbers<[1], [0], [0], [1], [0, 0, 1, 1], [], []>} : vector<8x128xbf16>, vector<128x128xbf16>, vector<8x128xf32> -> vector<8x128xf32>
    %24 = arith.addf %23, %16 : vector<8x128xf32>
    %cst_15 = arith.constant 0.000000e+00 : f32
    %25 = vector.broadcast %cst_15 : f32 to vector<8x128xf32>
    %26 = arith.maximumf %24, %25 : vector<8x128xf32>
    %27 = arith.truncf %26 : vector<8x128xf32> to vector<8x128xbf16>
    %cst_16 = arith.constant dense<0.000000e+00> : vector<8x128xf32>
    %28 = tpu.matmul %27, %13, %cst_16 {dimension_numbers = #tpu.dot_dimension_numbers<[1], [0], [0], [1], [0, 0, 1, 1], [], []>} : vector<8x128xbf16>, vector<128x128xbf16>, vector<8x128xf32> -> vector<8x128xf32>
    %29 = arith.addf %28, %16 : vector<8x128xf32>
    %cst_17 = arith.constant 0.000000e+00 : f32
    %30 = vector.broadcast %cst_17 : f32 to vector<8x128xf32>
    %31 = arith.maximumf %29, %30 : vector<8x128xf32>
    %32 = arith.truncf %31 : vector<8x128xf32> to vector<8x128xbf16>
    %c0_18 = arith.constant 0 : index
    %c0_19 = arith.constant 0 : index
    %33 = vector.load %arg6[%c0_18, %c0_19] : memref<128x128xbf16, #tpu.memory_space<vmem>>, vector<128x128xbf16>
    %cst_20 = arith.constant dense<0.000000e+00> : vector<8x128xf32>
    %34 = tpu.matmul %32, %33, %cst_20 {dimension_numbers = #tpu.dot_dimension_numbers<[1], [0], [0], [1], [0, 0, 1, 1], [], []>} : vector<8x128xbf16>, vector<128x128xbf16>, vector<8x128xf32> -> vector<8x128xf32>
    %35 = arith.addf %34, %5 : vector<8x128xf32>
    %c0_21 = arith.constant 0 : index
    %c0_22 = arith.constant 0 : index
    %36 = vector.load %arg8[%c0_21, %c0_22] : memref<8x128xf32, #tpu.memory_space<vmem>>, vector<8x128xf32>
    tpu.vector_store %arg8[%c0_21, %c0_22], %35 {strides = array<i32>} : memref<8x128xf32, #tpu.memory_space<vmem>>, vector<8x128xf32>,
    return
  }
  func.func @transform_0(%arg0: i32) -> (i32, i32) {
    %c0_i32 = arith.constant 0 : i32
    %c0_i32_0 = arith.constant 0 : i32
    return %arg0, %c0_i32 : i32, i32
  }
  func.func @transform_1(%arg0: i32) -> (i32, i32) {
    %c0_i32 = arith.constant 0 : i32
    %c0_i32_0 = arith.constant 0 : i32
    %c0_i32_1 = arith.constant 0 : i32
    return %c0_i32, %c0_i32_0 : i32, i32
  }
  func.func @transform_2(%arg0: i32) -> (i32, i32) {
    %c0_i32 = arith.constant 0 : i32
    %c0_i32_0 = arith.constant 0 : i32
    %c0_i32_1 = arith.constant 0 : i32
    return %c0_i32, %c0_i32_0 : i32, i32
  }
  func.func @transform_3(%arg0: i32) -> (i32, i32) {
    %c0_i32 = arith.constant 0 : i32
    %c0_i32_0 = arith.constant 0 : i32
    %c0_i32_1 = arith.constant 0 : i32
    return %c0_i32, %c0_i32_0 : i32, i32
  }
  func.func @transform_4(%arg0: i32) -> (i32, i32) {
    %c0_i32 = arith.constant 0 : i32
    %c0_i32_0 = arith.constant 0 : i32
    %c0_i32_1 = arith.constant 0 : i32
    return %c0_i32, %c0_i32_0 : i32, i32
  }
  func.func @transform_5(%arg0: i32) -> (i32, i32) {
    %c0_i32 = arith.constant 0 : i32
    %c0_i32_0 = arith.constant 0 : i32
    %c0_i32_1 = arith.constant 0 : i32
    return %c0_i32, %c0_i32_0 : i32, i32
  }
  func.func @transform_6(%arg0: i32) -> (i32, i32) {
    %c0_i32 = arith.constant 0 : i32
    %c0_i32_0 = arith.constant 0 : i32
    %c0_i32_1 = arith.constant 0 : i32
    return %c0_i32, %c0_i32_0 : i32, i32
  }
  func.func @transform_7(%arg0: i32) -> (i32, i32) {
    %c0_i32 = arith.constant 0 : i32
    %c0_i32_0 = arith.constant 0 : i32
    return %arg0, %c0_i32 : i32, i32
  }
}

module attributes {stable_mosaic.version = 11 : i64} {
  func.func @kernel(%arg0: i32, %arg1: memref<8x32xf32, #tpu.memory_space<vmem>>, %arg2: memref<32x128xbf16, #tpu.memory_space<vmem>>, %arg3: memref<1x128xf32, #tpu.memory_space<vmem>>, %arg4: memref<128x128xbf16, #tpu.memory_space<vmem>>, %arg5: memref<1x128xf32, #tpu.memory_space<vmem>>, %arg6: memref<128x128xbf16, #tpu.memory_space<vmem>>, %arg7: memref<1x128xf32, #tpu.memory_space<vmem>>, %arg8: memref<8x128xf32, #tpu.memory_space<vmem>>) attributes {dimension_semantics = [#tpu.dimension_semantics<parallel>], iteration_bounds = array<i64: 1>, scalar_prefetch = 0 : i64, scratch_operands = 0 : i64, tpu.core_type = #tpu.core_type<tc>, window_params = [{transform_indices = @transform_0, window_bounds = array<i64: 8, 32>}, {pipeline_mode = #tpu.pipeline_mode<synchronous>, transform_indices = @transform_1, window_bounds = array<i64: 32, 128>}, {pipeline_mode = #tpu.pipeline_mode<synchronous>, transform_indices = @transform_2, window_bounds = array<i64: 1, 128>}, {pipeline_mode = #tpu.pipeline_mode<synchronous>, transform_indices = @transform_3, window_bounds = array<i64: 128, 128>}, {pipeline_mode = #tpu.pipeline_mode<synchronous>, transform_indices = @transform_4, window_bounds = array<i64: 1, 128>}, {pipeline_mode = #tpu.pipeline_mode<synchronous>, transform_indices = @transform_5, window_bounds = array<i64: 128, 128>}, {pipeline_mode = #tpu.pipeline_mode<synchronous>, transform_indices = @transform_6, window_bounds = array<i64: 1, 128>}, {transform_indices = @transform_7, window_bounds = array<i64: 8, 128>}]} {
    %c0 = arith.constant 0 : index
    %c0_0 = arith.constant 0 : index
    %0 = vector.load %arg3[%c0, %c0_0] : memref<1x128xf32, #tpu.memory_space<vmem>>, vector<1x128xf32>
    %1 = vector.shape_cast %0 : vector<1x128xf32> to vector<1x128xf32>
    %2 = vector.broadcast %1 : vector<1x128xf32> to vector<8x128xf32>
    %c0_1 = arith.constant 0 : index
    %c0_2 = arith.constant 0 : index
    %3 = vector.load %arg7[%c0_1, %c0_2] : memref<1x128xf32, #tpu.memory_space<vmem>>, vector<1x128xf32>
    %4 = vector.shape_cast %3 : vector<1x128xf32> to vector<1x128xf32>
    %5 = vector.broadcast %4 : vector<1x128xf32> to vector<8x128xf32>
    %c0_3 = arith.constant 0 : index
    %c0_4 = arith.constant 0 : index
    %6 = vector.load %arg1[%c0_3, %c0_4] : memref<8x32xf32, #tpu.memory_space<vmem>>, vector<8x32xf32>
    %7 = arith.truncf %6 : vector<8x32xf32> to vector<8x32xbf16>
    %c0_5 = arith.constant 0 : index
    %c0_6 = arith.constant 0 : index
    %8 = vector.load %arg2[%c0_5, %c0_6] : memref<32x128xbf16, #tpu.memory_space<vmem>>, vector<32x128xbf16>
    %cst = arith.constant dense<0.000000e+00> : vector<8x128xf32>
    %9 = tpu.matmul %7, %8, %cst {dimension_numbers = #tpu.dot_dimension_numbers<[1], [0], [0], [1], [0, 0, 1, 1], [], []>} : vector<8x32xbf16>, vector<32x128xbf16>, vector<8x128xf32> -> vector<8x128xf32>
    %10 = arith.addf %9, %2 : vector<8x128xf32>
    %cst_7 = arith.constant 0.000000e+00 : f32
    %11 = vector.broadcast %cst_7 : f32 to vector<8x128xf32>
    %12 = arith.maximumf %10, %11 : vector<8x128xf32>
    %c0_8 = arith.constant 0 : index
    %c0_9 = arith.constant 0 : index
    %13 = vector.load %arg4[%c0_8, %c0_9] : memref<128x128xbf16, #tpu.memory_space<vmem>>, vector<128x128xbf16>
    %c0_10 = arith.constant 0 : index
    %c0_11 = arith.constant 0 : index
    %14 = vector.load %arg5[%c0_10, %c0_11] : memref<1x128xf32, #tpu.memory_space<vmem>>, vector<1x128xf32>
    %15 = vector.shape_cast %14 : vector<1x128xf32> to vector<1x128xf32>
    %16 = vector.broadcast %15 : vector<1x128xf32> to vector<8x128xf32>
    %17 = arith.truncf %12 : vector<8x128xf32> to vector<8x128xbf16>
    %cst_12 = arith.constant dense<0.000000e+00> : vector<8x128xf32>
    %18 = tpu.matmul %17, %13, %cst_12 {dimension_numbers = #tpu.dot_dimension_numbers<[1], [0], [0], [1], [0, 0, 1, 1], [], []>} : vector<8x128xbf16>, vector<128x128xbf16>, vector<8x128xf32> -> vector<8x128xf32>
    %19 = arith.addf %18, %16 : vector<8x128xf32>
    %cst_13 = arith.constant 0.000000e+00 : f32
    %20 = vector.broadcast %cst_13 : f32 to vector<8x128xf32>
    %21 = arith.maximumf %19, %20 : vector<8x128xf32>
    %22 = arith.truncf %21 : vector<8x128xf32> to vector<8x128xbf16>
    %cst_14 = arith.constant dense<0.000000e+00> : vector<8x128xf32>
    %23 = tpu.matmul %22, %13, %cst_14 {dimension_numbers = #tpu.dot_dimension_numbers<[1], [0], [0], [1], [0, 0, 1, 1], [], []>} : vector<8x128xbf16>, vector<128x128xbf16>, vector<8x128xf32> -> vector<8x128xf32>
    %24 = arith.addf %23, %16 : vector<8x128xf32>
    %cst_15 = arith.constant 0.000000e+00 : f32
    %25 = vector.broadcast %cst_15 : f32 to vector<8x128xf32>
    %26 = arith.maximumf %24, %25 : vector<8x128xf32>
    %27 = arith.truncf %26 : vector<8x128xf32> to vector<8x128xbf16>
    %cst_16 = arith.constant dense<0.000000e+00> : vector<8x128xf32>
    %28 = tpu.matmul %27, %13, %cst_16 {dimension_numbers = #tpu.dot_dimension_numbers<[1], [0], [0], [1], [0, 0, 1, 1], [], []>} : vector<8x128xbf16>, vector<128x128xbf16>, vector<8x128xf32> -> vector<8x128xf32>
    %29 = arith.addf %28, %16 : vector<8x128xf32>
    %cst_17 = arith.constant 0.000000e+00 : f32
    %30 = vector.broadcast %cst_17 : f32 to vector<8x128xf32>
    %31 = arith.maximumf %29, %30 : vector<8x128xf32>
    %32 = arith.truncf %31 : vector<8x128xf32> to vector<8x128xbf16>
    %c0_18 = arith.constant 0 : index
    %c0_19 = arith.constant 0 : index
    %33 = vector.load %arg6[%c0_18, %c0_19] : memref<128x128xbf16, #tpu.memory_space<vmem>>, vector<128x128xbf16>
    %cst_20 = arith.constant dense<0.000000e+00> : vector<8x128xf32>
    %34 = tpu.matmul %32, %33, %cst_20 {dimension_numbers = #tpu.dot_dimension_numbers<[1], [0], [0], [1], [0, 0, 1, 1], [], []>} : vector<8x128xbf16>, vector<128x128xbf16>, vector<8x128xf32> -> vector<8x128xf32>
    %35 = arith.addf %34, %5 : vector<8x128xf32>
    %c0_21 = arith.constant 0 : index
    %c0_22 = arith.constant 0 : index
    %36 = vector.load %arg8[%c0_21, %c0_22] : memref<8x128xf32, #tpu.memory_space<vmem>>, vector<8x128xf32>
    tpu.vector_store %arg8[%c0_21, %c0_22], %35 {strides = array<i32>} : memref<8x128xf32, #tpu.memory_space<vmem>>, vector<8x128xf32>,
    return
  }
  func.func @transform_0(%arg0: i32) -> (i32, i32) {
    %c0_i32 = arith.constant 0 : i32
    %c0_i32_0 = arith.constant 0 : i32
    return %arg0, %c0_i32 : i32, i32
  }
  func.func @transform_1(%arg0: i32) -> (i32, i32) {
    %c0_i32 = arith.constant 0 : i32
    %c0_i32_0 = arith.constant 0 : i32
    %c0_i32_1 = arith.constant 0 : i32
    return %c0_i32, %c0_i32_0 : i32, i32
  }
  func.func @transform_2(%arg0: i32) -> (i32, i32) {
    %c0_i32 = arith.constant 0 : i32
    %c0_i32_0 = arith.constant 0 : i32
    %c0_i32_1 = arith.constant 0 : i32
    return %c0_i32, %c0_i32_0 : i32, i32
  }
  func.func @transform_3(%arg0: i32) -> (i32, i32) {
    %c0_i32 = arith.constant 0 : i32
    %c0_i32_0 = arith.constant 0 : i32
    %c0_i32_1 = arith.constant 0 : i32
    return %c0_i32, %c0_i32_0 : i32, i32
  }
  func.func @transform_4(%arg0: i32) -> (i32, i32) {
    %c0_i32 = arith.constant 0 : i32
    %c0_i32_0 = arith.constant 0 : i32
    %c0_i32_1 = arith.constant 0 : i32
    return %c0_i32, %c0_i32_0 : i32, i32
  }
  func.func @transform_5(%arg0: i32) -> (i32, i32) {
    %c0_i32 = arith.constant 0 : i32
    %c0_i32_0 = arith.constant 0 : i32
    %c0_i32_1 = arith.constant 0 : i32
    return %c0_i32, %c0_i32_0 : i32, i32
  }
  func.func @transform_6(%arg0: i32) -> (i32, i32) {
    %c0_i32 = arith.constant 0 : i32
    %c0_i32_0 = arith.constant 0 : i32
    %c0_i32_1 = arith.constant 0 : i32
    return %c0_i32, %c0_i32_0 : i32, i32
  }
  func.func @transform_7(%arg0: i32) -> (i32, i32) {
    %c0_i32 = arith.constant 0 : i32
    %c0_i32_0 = arith.constant 0 : i32
    return %arg0, %c0_i32 : i32, i32
  }
}

</mosaic_0001>

<llo_original>
// kernel: tpu_custom_call.1
$region0: #{tpu_custom_call.1}
  #allocation0 [shape = 'u32[]', space=smem, size = 0x4, offset = 0x4, fixed_abs, tag = 'smem constant byte address 0x4 - core index']
  #allocation1 [shape = 'u32[144,128]{1,0:T(1,128)}', space=vmem, size = 0x12000, scoped, tag = 'internal scratch']
  %s0 = inlined_call_operand.hbm [shape: f32[8,32], index: 0, kind: input, shape index: {}]
  %s1 = inlined_call_operand.hbm [shape: bf16[32,128], index: 1, kind: input, shape index: {}]
  %s2 = inlined_call_operand.vmem [shape: f32[1,128], index: 2, kind: input, shape index: {}]
  %s3 = inlined_call_operand.hbm [shape: bf16[128,128], index: 3, kind: input, shape index: {}]
  %s4 = inlined_call_operand.vmem [shape: f32[1,128], index: 4, kind: input, shape index: {}]
  %s5 = inlined_call_operand.hbm [shape: bf16[128,128], index: 5, kind: input, shape index: {}]
  %s6 = inlined_call_operand.vmem [shape: f32[1,128], index: 6, kind: input, shape index: {}]
  %s7 = inlined_call_operand.hbm [shape: f32[8,128], index: 7, kind: output, shape index: {}]
  %s8 = sld [smem:[#allocation0]]
  $region54: #{tpu_custom_call.1} parent=0
    _
  %s10 = ssub.s32 1, %s8
  %s11 = scalar_select 0, %s10, %s8
  $region1: #{tpu_custom_call.1} parent=0
    #allocation2 [shape = 'u8[4096]{0}', space=vmem, size = 0x1000, scoped, tag = 'input window, operand 0, single buffered']
    #allocation3 [shape = 's32[1]{0}', space=sflag, size = 0x4, scoped, tag = 'scoped memory for tpu_custom_call.1']
    #allocation4 [shape = 's32[1]{0}', space=sflag, size = 0x4, scoped, tag = 'scoped memory for tpu_custom_call.1']
    #allocation5 [shape = 'u8[8192]{0}', space=vmem, size = 0x2000, scoped, tag = 'input window, operand 1, single buffered']
    #allocation6 [shape = 's32[1]{0}', space=sflag, size = 0x4, scoped, tag = 'scoped memory for tpu_custom_call.1']
    #allocation7 [shape = 'u8[32768]{0}', space=vmem, size = 0x8000, scoped, tag = 'input window, operand 3, single buffered']
    #allocation8 [shape = 'u8[32768]{0}', space=vmem, size = 0x8000, scoped, tag = 'input window, operand 5, single buffered']
    #allocation9 [shape = 's32[1]{0}', space=sflag, size = 0x4, scoped, tag = 'scoped memory for tpu_custom_call.1']
    #allocation10 [shape = 'u8[4096]{0}', space=vmem, size = 0x1000, scoped, tag = 'output window, operand 0, single buffered']
    %12 = vsyncpa [#allocation3], 0
    %13 = vsyncpa [#allocation6], 0
    %14 = vsyncpa [#allocation9], 0
    %15 = vsyncpa [#allocation4], 0
    // Predicated region
    $region2: #{tpu_custom_call.1} parent=1 // pred_check
      _
    $region3: #{tpu_custom_call.1} parent=1 // pred_check_branch
      %17 = sbr.rel (0) target = $region5
    $region4: #{tpu_custom_call.1} parent=1 // pred_region
      %s19 = ssub.s32 128, 128
      %20 = vsyncadd [#allocation3], %s19
      %s22 = sshll.u32 [#allocation2], 4
      %s23 = int_to_ptr.vmem [resolvable:$true] %s22
      %25 = dma.hbm_to_vmem [thread:$0]  %s0, 128, %s23, [#allocation3]
    $region5: #{tpu_custom_call.1} parent=1 // pred_fallthru
      _
    // Predicated region
    $region6: #{tpu_custom_call.1} parent=1 // pred_check
      _
    $region7: #{tpu_custom_call.1} parent=1 // pred_check_branch
      %27 = sbr.rel (0) target = $region9
    $region8: #{tpu_custom_call.1} parent=1 // pred_region
      %s29 = ssub.s32 256, 256
      %30 = vsyncadd [#allocation6], %s29
      %s31 = sshll.u32 [#allocation5], 4
      %s32 = int_to_ptr.vmem [resolvable:$true] %s31
      %37 = dma.hbm_to_vmem [thread:$0]  %s1, 256, %s32, [#allocation6], 64, 64, 4
    $region9: #{tpu_custom_call.1} parent=1 // pred_fallthru
      _
    // Predicated region
    $region10: #{tpu_custom_call.1} parent=1 // pred_check
      _
    $region11: #{tpu_custom_call.1} parent=1 // pred_check_branch
      %39 = sbr.rel (0) target = $region13
    $region12: #{tpu_custom_call.1} parent=1 // pred_region
      _
    $region13: #{tpu_custom_call.1} parent=1 // pred_fallthru
      _
    // Predicated region
    $region14: #{tpu_custom_call.1} parent=1 // pred_check
      _
    $region15: #{tpu_custom_call.1} parent=1 // pred_check_branch
      %41 = sbr.rel (0) target = $region17
    $region16: #{tpu_custom_call.1} parent=1 // pred_region
      %s43 = ssub.s32 1024, 1024
      %44 = vsyncadd [#allocation6], %s43
      %s45 = sshll.u32 [#allocation7], 4
      %s46 = int_to_ptr.vmem [resolvable:$true] %s45
      %51 = dma.hbm_to_vmem [thread:$0]  %s3, 1024, %s46, [#allocation6], 64, 64, 4
    $region17: #{tpu_custom_call.1} parent=1 // pred_fallthru
      _
    // Predicated region
    $region18: #{tpu_custom_call.1} parent=1 // pred_check
      _
    $region19: #{tpu_custom_call.1} parent=1 // pred_check_branch
      %53 = sbr.rel (0) target = $region21
    $region20: #{tpu_custom_call.1} parent=1 // pred_region
      _
    $region21: #{tpu_custom_call.1} parent=1 // pred_fallthru
      _
    // Predicated region
    $region22: #{tpu_custom_call.1} parent=1 // pred_check
      _
    $region23: #{tpu_custom_call.1} parent=1 // pred_check_branch
      %55 = sbr.rel (0) target = $region25
    $region24: #{tpu_custom_call.1} parent=1 // pred_region
      %s57 = ssub.s32 1024, 1024
      %58 = vsyncadd [#allocation9], %s57
      %s59 = sshll.u32 [#allocation8], 4
      %s60 = int_to_ptr.vmem [resolvable:$true] %s59
      %65 = dma.hbm_to_vmem [thread:$0]  %s5, 1024, %s60, [#allocation9], 64, 64, 4
    $region25: #{tpu_custom_call.1} parent=1 // pred_fallthru
      _
    // Predicated region
    $region26: #{tpu_custom_call.1} parent=1 // pred_check
      _
    $region27: #{tpu_custom_call.1} parent=1 // pred_check_branch
      %67 = sbr.rel (0) target = $region29
    $region28: #{tpu_custom_call.1} parent=1 // pred_region
      _
    $region29: #{tpu_custom_call.1} parent=1 // pred_fallthru
      _
    // Predicated region
    $region30: #{tpu_custom_call.1} parent=1 // pred_check
      _
    $region31: #{tpu_custom_call.1} parent=1 // pred_check_branch
      %69 = sbr.rel (0) target = $region33
    $region32: #{tpu_custom_call.1} parent=1 // pred_region
      %70 = dma.done [#allocation3], 128
    $region33: #{tpu_custom_call.1} parent=1 // pred_fallthru
      _
    // Predicated region
    $region34: #{tpu_custom_call.1} parent=1 // pred_check
      _
    $region35: #{tpu_custom_call.1} parent=1 // pred_check_branch
      %72 = sbr.rel (0) target = $region37
    $region36: #{tpu_custom_call.1} parent=1 // pred_region
      %73 = dma.done [#allocation6], 256
    $region37: #{tpu_custom_call.1} parent=1 // pred_fallthru
      _
    // Predicated region
    $region38: #{tpu_custom_call.1} parent=1 // pred_check
      _
    $region39: #{tpu_custom_call.1} parent=1 // pred_check_branch
      %75 = sbr.rel (0) target = $region41
    $region40: #{tpu_custom_call.1} parent=1 // pred_region
      %76 = dma.done [#allocation6], 1024
    $region41: #{tpu_custom_call.1} parent=1 // pred_fallthru
      _
    // Predicated region
    $region42: #{tpu_custom_call.1} parent=1 // pred_check
      _
    $region43: #{tpu_custom_call.1} parent=1 // pred_check_branch
      %78 = sbr.rel (0) target = $region45
    $region44: #{tpu_custom_call.1} parent=1 // pred_region
      %79 = dma.done [#allocation9], 1024
    $region45: #{tpu_custom_call.1} parent=1 // pred_fallthru
      _
    %v81 = vld [vmem:[%s2] sm:$0x1]
    %v83 = vlaneseq
    %v84 = vshrl.u32 %v83, 7
    %v85 = vsub.s32 0, %v84
    %v86 = vrot.slane %v81, %v85
    %v88 = vld [vmem:[%s6] sm:$0x1]
    %v90 = vlaneseq
    %v91 = vshrl.u32 %v90, 7
    %v92 = vsub.s32 0, %v91
    %v93 = vrot.slane %v88, %v92
    %v95 = vld [vmem:[#allocation2] sm:$0xff]
    %v96 = vpack.c.bf16 %v95, %v95
    %v97 = vld [vmem:[#allocation5] sm:$0xf]
    %v98 = vld [vmem:[#allocation5 + $0x4] sm:$0xf]
    %v99 = vld [vmem:[#allocation5 + $0x8] sm:$0xf]
    %v100 = vld [vmem:[#allocation5 + $0xc] sm:$0xf]
    %v105 = vunpack.c.l.b16 %v97
    %v106 = vunpack.c.l.b16 %v98
    %v107 = vunpack.c.l.b16 %v99
    %v108 = vunpack.c.l.b16 %v100
    %v109 = vpack.c.b16 %v106, %v105
    %v110 = vpack.c.b16 %v108, %v107
    %vm113 = vcmask 261120
    %v115 = vsel %vm113, %v96, 0
    %117 = vmatprep.subr.bf16.mxu0 0
    %118 = vmatpush1.bf16.msra.mxu0 %v109
    %119 = vmatprep.subr.bf16.mxu0 0
    %120 = vmatpush1.bf16.msra.mxu0 %v110
    %121 = vmatprep.subr.bf16.mxu0 0
    %122 = vmatpush1.bf16.msra.mxu0 0
    %123 = vmatprep.subr.bf16.mxu0 0
    %124 = vmatpush1.bf16.msra.mxu0 0
    %125 = vmatprep.subr.bf16.mxu0 0
    %126 = vmatpush1.bf16.msra.mxu0 0
    %127 = vmatprep.subr.bf16.mxu0 0
    %128 = vmatpush1.bf16.msra.mxu0 0
    %129 = vmatprep.subr.bf16.mxu0 0
    %130 = vmatpush1.bf16.msra.mxu0 0
    %131 = vmatprep.subr.bf16.mxu0 0
    %132 = vmatpush1.bf16.msra.mxu0 0
    %133 = vmatprep.subr.bf16.mxu0 0
    %134 = vmatpush1.bf16.msra.mxu0 0
    %135 = vmatprep.subr.bf16.mxu0 0
    %136 = vmatpush1.bf16.msra.mxu0 0
    %137 = vmatprep.subr.bf16.mxu0 0
    %138 = vmatpush1.bf16.msra.mxu0 0
    %139 = vmatprep.subr.bf16.mxu0 0
    %140 = vmatpush1.bf16.msra.mxu0 0
    %141 = vmatprep.subr.bf16.mxu0 0
    %142 = vmatpush1.bf16.msra.mxu0 0
    %143 = vmatprep.subr.bf16.mxu0 0
    %144 = vmatpush1.bf16.msra.mxu0 0
    %145 = vmatprep.subr.bf16.mxu0 0
    %146 = vmatpush1.bf16.msra.mxu0 0
    %147 = vmatprep.subr.bf16.mxu0 0
    %148 = vmatpush1.bf16.msra.mxu0 0
    %149 = vmatprep.mubr.bf16.mxu0 0
    %150 = vmatmul.mubr.bf16.gmra.mrb[0].mxu0 %v115
    %v151 = vpop.f32.mrb[0].mxu0
    %v152 = vadd.f32 %v86, %v151
    %v153 = vpop.f32.mrb[0].mxu0
    %v154 = vpop.f32.mrb[0].mxu0
    %v155 = vpop.f32.mrb[0].mxu0
    %156 = vdwg.mxu0
    %v157 = vmax.f32 %v152, 0.0
    %v158 = vld [vmem:[#allocation7] sm:$0xf]
    %v159 = vld [vmem:[#allocation7 + $0x4] sm:$0xf]
    %v160 = vld [vmem:[#allocation7 + $0x8] sm:$0xf]
    %v161 = vld [vmem:[#allocation7 + $0xc] sm:$0xf]
    %v162 = vld [vmem:[#allocation7 + $0x10] sm:$0xf]
    %v163 = vld [vmem:[#allocation7 + $0x14] sm:$0xf]
    %v164 = vld [vmem:[#allocation7 + $0x18] sm:$0xf]
    %v165 = vld [vmem:[#allocation7 + $0x1c] sm:$0xf]
    %v166 = vld [vmem:[#allocation7 + $0x20] sm:$0xf]
    %v167 = vld [vmem:[#allocation7 + $0x24] sm:$0xf]
    %v168 = vld [vmem:[#allocation7 + $0x28] sm:$0xf]
    %v169 = vld [vmem:[#allocation7 + $0x2c] sm:$0xf]
    %v170 = vld [vmem:[#allocation7 + $0x30] sm:$0xf]
    %v171 = vld [vmem:[#allocation7 + $0x34] sm:$0xf]
    %v172 = vld [vmem:[#allocation7 + $0x38] sm:$0xf]
    %v173 = vld [vmem:[#allocation7 + $0x3c] sm:$0xf]
    %v174 = vld [vmem:[%s4] sm:$0x1]
    %v176 = vlaneseq
    %v177 = vshrl.u32 %v176, 7
    %v178 = vsub.s32 0, %v177
    %v179 = vrot.slane %v174, %v178
    %v181 = vpack.c.bf16 %v157, %v157
    %v198 = vunpack.c.l.b16 %v158
    %v199 = vunpack.c.l.b16 %v159
    %v200 = vunpack.c.l.b16 %v160
    %v201 = vunpack.c.l.b16 %v161
    %v202 = vunpack.c.l.b16 %v162
    %v203 = vunpack.c.l.b16 %v163
    %v204 = vunpack.c.l.b16 %v164
    %v205 = vunpack.c.l.b16 %v165
    %v206 = vunpack.c.l.b16 %v166
    %v207 = vunpack.c.l.b16 %v167
    %v208 = vunpack.c.l.b16 %v168
    %v209 = vunpack.c.l.b16 %v169
    %v210 = vunpack.c.l.b16 %v170
    %v211 = vunpack.c.l.b16 %v171
    %v212 = vunpack.c.l.b16 %v172
    %v213 = vunpack.c.l.b16 %v173
    %v214 = vpack.c.b16 %v199, %v198
    %v215 = vpack.c.b16 %v201, %v200
    %v216 = vpack.c.b16 %v203, %v202
    %v217 = vpack.c.b16 %v205, %v204
    %v218 = vpack.c.b16 %v207, %v206
    %v219 = vpack.c.b16 %v209, %v208
    %v220 = vpack.c.b16 %v211, %v210
    %v221 = vpack.c.b16 %v213, %v212
    %230 = vmatprep.subr.bf16.mxu0 0
    %231 = vmatpush1.bf16.msra.mxu0 %v214
    %232 = vmatprep.subr.bf16.mxu0 0
    %233 = vmatpush1.bf16.msra.mxu0 %v215
    %234 = vmatprep.subr.bf16.mxu0 0
    %235 = vmatpush1.bf16.msra.mxu0 %v216
    %236 = vmatprep.subr.bf16.mxu0 0
    %237 = vmatpush1.bf16.msra.mxu0 %v217
    %238 = vmatprep.subr.bf16.mxu0 0
    %239 = vmatpush1.bf16.msra.mxu0 %v218
    %240 = vmatprep.subr.bf16.mxu0 0
    %241 = vmatpush1.bf16.msra.mxu0 %v219
    %242 = vmatprep.subr.bf16.mxu0 0
    %243 = vmatpush1.bf16.msra.mxu0 %v220
    %244 = vmatprep.subr.bf16.mxu0 0
    %245 = vmatpush1.bf16.msra.mxu0 %v221
    %246 = vmatprep.subr.bf16.mxu0 0
    %247 = vmatpush1.bf16.msra.mxu0 0
    %248 = vmatprep.subr.bf16.mxu0 0
    %249 = vmatpush1.bf16.msra.mxu0 0
    %250 = vmatprep.subr.bf16.mxu0 0
    %251 = vmatpush1.bf16.msra.mxu0 0
    %252 = vmatprep.subr.bf16.mxu0 0
    %253 = vmatpush1.bf16.msra.mxu0 0
    %254 = vmatprep.subr.bf16.mxu0 0
    %255 = vmatpush1.bf16.msra.mxu0 0
    %256 = vmatprep.subr.bf16.mxu0 0
    %257 = vmatpush1.bf16.msra.mxu0 0
    %258 = vmatprep.subr.bf16.mxu0 0
    %259 = vmatpush1.bf16.msra.mxu0 0
    %260 = vmatprep.subr.bf16.mxu0 0
    %261 = vmatpush1.bf16.msra.mxu0 0
    %262 = vmatprep.mubr.bf16.mxu0 0
    %263 = vmatmul.mubr.bf16.gmra.mrb[0].mxu0 %v181
    %v264 = vpop.f32.mrb[0].mxu0
    %v265 = vadd.f32 %v179, %v264
    %v266 = vpop.f32.mrb[0].mxu0
    %v267 = vpop.f32.mrb[0].mxu0
    %v268 = vpop.f32.mrb[0].mxu0
    %269 = vdwg.mxu0
    %v270 = vmax.f32 %v265, 0.0
    %v271 = vpack.c.bf16 %v270, %v270
    %272 = vmatprep.subr.bf16.mxu0 0
    %273 = vmatpush1.bf16.msra.mxu0 %v214
    %274 = vmatprep.subr.bf16.mxu0 0
    %275 = vmatpush1.bf16.msra.mxu0 %v215
    %276 = vmatprep.subr.bf16.mxu0 0
    %277 = vmatpush1.bf16.msra.mxu0 %v216
    %278 = vmatprep.subr.bf16.mxu0 0
    %279 = vmatpush1.bf16.msra.mxu0 %v217
    %280 = vmatprep.subr.bf16.mxu0 0
    %281 = vmatpush1.bf16.msra.mxu0 %v218
    %282 = vmatprep.subr.bf16.mxu0 0
    %283 = vmatpush1.bf16.msra.mxu0 %v219
    %284 = vmatprep.subr.bf16.mxu0 0
    %285 = vmatpush1.bf16.msra.mxu0 %v220
    %286 = vmatprep.subr.bf16.mxu0 0
    %287 = vmatpush1.bf16.msra.mxu0 %v221
    %288 = vmatprep.subr.bf16.mxu0 0
    %289 = vmatpush1.bf16.msra.mxu0 0
    %290 = vmatprep.subr.bf16.mxu0 0
    %291 = vmatpush1.bf16.msra.mxu0 0
    %292 = vmatprep.subr.bf16.mxu0 0
    %293 = vmatpush1.bf16.msra.mxu0 0
    %294 = vmatprep.subr.bf16.mxu0 0
    %295 = vmatpush1.bf16.msra.mxu0 0
    %296 = vmatprep.subr.bf16.mxu0 0
    %297 = vmatpush1.bf16.msra.mxu0 0
    %298 = vmatprep.subr.bf16.mxu0 0
    %299 = vmatpush1.bf16.msra.mxu0 0
    %300 = vmatprep.subr.bf16.mxu0 0
    %301 = vmatpush1.bf16.msra.mxu0 0
    %302 = vmatprep.subr.bf16.mxu0 0
    %303 = vmatpush1.bf16.msra.mxu0 0
    %304 = vmatprep.mubr.bf16.mxu0 0
    %305 = vmatmul.mubr.bf16.gmra.mrb[0].mxu0 %v271
    %v306 = vpop.f32.mrb[0].mxu0
    %v307 = vadd.f32 %v179, %v306
    %v308 = vpop.f32.mrb[0].mxu0
    %v309 = vpop.f32.mrb[0].mxu0
    %v310 = vpop.f32.mrb[0].mxu0
    %311 = vdwg.mxu0
    %v312 = vmax.f32 %v307, 0.0
    %v313 = vpack.c.bf16 %v312, %v312
    %314 = vmatprep.subr.bf16.mxu0 0
    %315 = vmatpush1.bf16.msra.mxu0 %v214
    %316 = vmatprep.subr.bf16.mxu0 0
    %317 = vmatpush1.bf16.msra.mxu0 %v215
    %318 = vmatprep.subr.bf16.mxu0 0
    %319 = vmatpush1.bf16.msra.mxu0 %v216
    %320 = vmatprep.subr.bf16.mxu0 0
    %321 = vmatpush1.bf16.msra.mxu0 %v217
    %322 = vmatprep.subr.bf16.mxu0 0
    %323 = vmatpush1.bf16.msra.mxu0 %v218
    %324 = vmatprep.subr.bf16.mxu0 0
    %325 = vmatpush1.bf16.msra.mxu0 %v219
    %326 = vmatprep.subr.bf16.mxu0 0
    %327 = vmatpush1.bf16.msra.mxu0 %v220
    %328 = vmatprep.subr.bf16.mxu0 0
    %329 = vmatpush1.bf16.msra.mxu0 %v221
    %330 = vmatprep.subr.bf16.mxu0 0
    %331 = vmatpush1.bf16.msra.mxu0 0
    %332 = vmatprep.subr.bf16.mxu0 0
    %333 = vmatpush1.bf16.msra.mxu0 0
    %334 = vmatprep.subr.bf16.mxu0 0
    %335 = vmatpush1.bf16.msra.mxu0 0
    %336 = vmatprep.subr.bf16.mxu0 0
    %337 = vmatpush1.bf16.msra.mxu0 0
    %338 = vmatprep.subr.bf16.mxu0 0
    %339 = vmatpush1.bf16.msra.mxu0 0
    %340 = vmatprep.subr.bf16.mxu0 0
    %341 = vmatpush1.bf16.msra.mxu0 0
    %342 = vmatprep.subr.bf16.mxu0 0
    %343 = vmatpush1.bf16.msra.mxu0 0
    %344 = vmatprep.subr.bf16.mxu0 0
    %345 = vmatpush1.bf16.msra.mxu0 0
    %346 = vmatprep.mubr.bf16.mxu0 0
    %347 = vmatmul.mubr.bf16.gmra.mrb[0].mxu0 %v313
    %v348 = vpop.f32.mrb[0].mxu0
    %v349 = vadd.f32 %v179, %v348
    %v350 = vpop.f32.mrb[0].mxu0
    %v351 = vpop.f32.mrb[0].mxu0
    %v352 = vpop.f32.mrb[0].mxu0
    %353 = vdwg.mxu0
    %v354 = vmax.f32 %v349, 0.0
    %v355 = vpack.c.bf16 %v354, %v354
    %v356 = vld [vmem:[#allocation8] sm:$0xf]
    %v357 = vld [vmem:[#allocation8 + $0x4] sm:$0xf]
    %v358 = vld [vmem:[#allocation8 + $0x8] sm:$0xf]
    %v359 = vld [vmem:[#allocation8 + $0xc] sm:$0xf]
    %v360 = vld [vmem:[#allocation8 + $0x10] sm:$0xf]
    %v361 = vld [vmem:[#allocation8 + $0x14] sm:$0xf]
    %v362 = vld [vmem:[#allocation8 + $0x18] sm:$0xf]
    %v363 = vld [vmem:[#allocation8 + $0x1c] sm:$0xf]
    %v364 = vld [vmem:[#allocation8 + $0x20] sm:$0xf]
    %v365 = vld [vmem:[#allocation8 + $0x24] sm:$0xf]
    %v366 = vld [vmem:[#allocation8 + $0x28] sm:$0xf]
    %v367 = vld [vmem:[#allocation8 + $0x2c] sm:$0xf]
    %v368 = vld [vmem:[#allocation8 + $0x30] sm:$0xf]
    %v369 = vld [vmem:[#allocation8 + $0x34] sm:$0xf]
    %v370 = vld [vmem:[#allocation8 + $0x38] sm:$0xf]
    %v371 = vld [vmem:[#allocation8 + $0x3c] sm:$0xf]
    %v388 = vunpack.c.l.b16 %v356
    %v389 = vunpack.c.l.b16 %v357
    %v390 = vunpack.c.l.b16 %v358
    %v391 = vunpack.c.l.b16 %v359
    %v392 = vunpack.c.l.b16 %v360
    %v393 = vunpack.c.l.b16 %v361
    %v394 = vunpack.c.l.b16 %v362
    %v395 = vunpack.c.l.b16 %v363
    %v396 = vunpack.c.l.b16 %v364
    %v397 = vunpack.c.l.b16 %v365
    %v398 = vunpack.c.l.b16 %v366
    %v399 = vunpack.c.l.b16 %v367
    %v400 = vunpack.c.l.b16 %v368
    %v401 = vunpack.c.l.b16 %v369
    %v402 = vunpack.c.l.b16 %v370
    %v403 = vunpack.c.l.b16 %v371
    %v404 = vpack.c.b16 %v389, %v388
    %v405 = vpack.c.b16 %v391, %v390
    %v406 = vpack.c.b16 %v393, %v392
    %v407 = vpack.c.b16 %v395, %v394
    %v408 = vpack.c.b16 %v397, %v396
    %v409 = vpack.c.b16 %v399, %v398
    %v410 = vpack.c.b16 %v401, %v400
    %v411 = vpack.c.b16 %v403, %v402
    %420 = vmatprep.subr.bf16.mxu0 0
    %421 = vmatpush1.bf16.msra.mxu0 %v404
    %422 = vmatprep.subr.bf16.mxu0 0
    %423 = vmatpush1.bf16.msra.mxu0 %v405
    %424 = vmatprep.subr.bf16.mxu0 0
    %425 = vmatpush1.bf16.msra.mxu0 %v406
    %426 = vmatprep.subr.bf16.mxu0 0
    %427 = vmatpush1.bf16.msra.mxu0 %v407
    %428 = vmatprep.subr.bf16.mxu0 0
    %429 = vmatpush1.bf16.msra.mxu0 %v408
    %430 = vmatprep.subr.bf16.mxu0 0
    %431 = vmatpush1.bf16.msra.mxu0 %v409
    %432 = vmatprep.subr.bf16.mxu0 0
    %433 = vmatpush1.bf16.msra.mxu0 %v410
    %434 = vmatprep.subr.bf16.mxu0 0
    %435 = vmatpush1.bf16.msra.mxu0 %v411
    %436 = vmatprep.subr.bf16.mxu0 0
    %437 = vmatpush1.bf16.msra.mxu0 0
    %438 = vmatprep.subr.bf16.mxu0 0
    %439 = vmatpush1.bf16.msra.mxu0 0
    %440 = vmatprep.subr.bf16.mxu0 0
    %441 = vmatpush1.bf16.msra.mxu0 0
    %442 = vmatprep.subr.bf16.mxu0 0
    %443 = vmatpush1.bf16.msra.mxu0 0
    %444 = vmatprep.subr.bf16.mxu0 0
    %445 = vmatpush1.bf16.msra.mxu0 0
    %446 = vmatprep.subr.bf16.mxu0 0
    %447 = vmatpush1.bf16.msra.mxu0 0
    %448 = vmatprep.subr.bf16.mxu0 0
    %449 = vmatpush1.bf16.msra.mxu0 0
    %450 = vmatprep.subr.bf16.mxu0 0
    %451 = vmatpush1.bf16.msra.mxu0 0
    %452 = vmatprep.mubr.bf16.mxu0 0
    %453 = vmatmul.mubr.bf16.gmra.mrb[0].mxu0 %v355
    %v454 = vpop.f32.mrb[0].mxu0
    %v455 = vadd.f32 %v93, %v454
    %v456 = vpop.f32.mrb[0].mxu0
    %v457 = vpop.f32.mrb[0].mxu0
    %v458 = vpop.f32.mrb[0].mxu0
    %459 = vdwg.mxu0
    %460 = vst [vmem:[#allocation10] sm:$0xff] %v455
    // Predicated region
    $region46: #{tpu_custom_call.1} parent=1 // pred_check
      _
    $region47: #{tpu_custom_call.1} parent=1 // pred_check_branch
      %462 = sbr.rel (0) target = $region49
    $region48: #{tpu_custom_call.1} parent=1 // pred_region
      %s464 = ssub.s32 128, 128
      %465 = vsyncadd [#allocation4], %s464
      %s467 = sshll.u32 [#allocation10], 4
      %s468 = int_to_ptr.vmem [resolvable:$true] %s467
      %470 = dma.vmem_to_hbm [thread:$0]  %s468, 128, %s7, [#allocation4]
    $region49: #{tpu_custom_call.1} parent=1 // pred_fallthru
      _
    // Predicated region
    $region50: #{tpu_custom_call.1} parent=1 // pred_check
      _
    $region51: #{tpu_custom_call.1} parent=1 // pred_check_branch
      %472 = sbr.rel (0) target = $region53
    $region52: #{tpu_custom_call.1} parent=1 // pred_region
      %473 = dma.done [#allocation4], 128
    $region53: #{tpu_custom_call.1} parent=1 // pred_fallthru
      _
    %474 = vsyncpa [#allocation3], 1
    %475 = vsyncpa [#allocation6], 1
    %476 = vsyncpa [#allocation9], 1
    %477 = vsyncpa [#allocation4], 1

// kernel: tpu_custom_call.1
$region0: #{tpu_custom_call.1}
  #allocation0 [shape = 'u32[]', space=smem, size = 0x4, offset = 0x4, fixed_abs, tag = 'smem constant byte address 0x4 - core index']
  #allocation1 [shape = 'u32[144,128]{1,0:T(1,128)}', space=vmem, size = 0x12000, scoped, tag = 'internal scratch']
  %s0 = inlined_call_operand.hbm [shape: f32[8,32], index: 0, kind: input, shape index: {}]
  %s1 = inlined_call_operand.hbm [shape: bf16[32,128], index: 1, kind: input, shape index: {}]
  %s2 = inlined_call_operand.vmem [shape: f32[1,128], index: 2, kind: input, shape index: {}]
  %s3 = inlined_call_operand.hbm [shape: bf16[128,128], index: 3, kind: input, shape index: {}]
  %s4 = inlined_call_operand.vmem [shape: f32[1,128], index: 4, kind: input, shape index: {}]
  %s5 = inlined_call_operand.hbm [shape: bf16[128,128], index: 5, kind: input, shape index: {}]
  %s6 = inlined_call_operand.vmem [shape: f32[1,128], index: 6, kind: input, shape index: {}]
  %s7 = inlined_call_operand.hbm [shape: f32[8,128], index: 7, kind: output, shape index: {}]
  %s8 = sld [smem:[#allocation0]]
  $region54: #{tpu_custom_call.1} parent=0
    _
  %s10 = ssub.s32 1, %s8
  %s11 = scalar_select 0, %s10, %s8
  $region1: #{tpu_custom_call.1} parent=0
    #allocation2 [shape = 'u8[4096]{0}', space=vmem, size = 0x1000, scoped, tag = 'input window, operand 0, single buffered']
    #allocation3 [shape = 's32[1]{0}', space=sflag, size = 0x4, scoped, tag = 'scoped memory for tpu_custom_call.1']
    #allocation4 [shape = 's32[1]{0}', space=sflag, size = 0x4, scoped, tag = 'scoped memory for tpu_custom_call.1']
    #allocation5 [shape = 'u8[8192]{0}', space=vmem, size = 0x2000, scoped, tag = 'input window, operand 1, single buffered']
    #allocation6 [shape = 's32[1]{0}', space=sflag, size = 0x4, scoped, tag = 'scoped memory for tpu_custom_call.1']
    #allocation7 [shape = 'u8[32768]{0}', space=vmem, size = 0x8000, scoped, tag = 'input window, operand 3, single buffered']
    #allocation8 [shape = 'u8[32768]{0}', space=vmem, size = 0x8000, scoped, tag = 'input window, operand 5, single buffered']
    #allocation9 [shape = 's32[1]{0}', space=sflag, size = 0x4, scoped, tag = 'scoped memory for tpu_custom_call.1']
    #allocation10 [shape = 'u8[4096]{0}', space=vmem, size = 0x1000, scoped, tag = 'output window, operand 0, single buffered']
    %12 = vsyncpa [#allocation3], 0
    %13 = vsyncpa [#allocation6], 0
    %14 = vsyncpa [#allocation9], 0
    %15 = vsyncpa [#allocation4], 0
    // Predicated region
    $region2: #{tpu_custom_call.1} parent=1 // pred_check
      _
    $region3: #{tpu_custom_call.1} parent=1 // pred_check_branch
      %17 = sbr.rel (0) target = $region5
    $region4: #{tpu_custom_call.1} parent=1 // pred_region
      %s19 = ssub.s32 128, 128
      %20 = vsyncadd [#allocation3], %s19
      %s22 = sshll.u32 [#allocation2], 4
      %s23 = int_to_ptr.vmem [resolvable:$true] %s22
      %25 = dma.hbm_to_vmem [thread:$0]  %s0, 128, %s23, [#allocation3]
    $region5: #{tpu_custom_call.1} parent=1 // pred_fallthru
      _
    // Predicated region
    $region6: #{tpu_custom_call.1} parent=1 // pred_check
      _
    $region7: #{tpu_custom_call.1} parent=1 // pred_check_branch
      %27 = sbr.rel (0) target = $region9
    $region8: #{tpu_custom_call.1} parent=1 // pred_region
      %s29 = ssub.s32 256, 256
      %30 = vsyncadd [#allocation6], %s29
      %s31 = sshll.u32 [#allocation5], 4
      %s32 = int_to_ptr.vmem [resolvable:$true] %s31
      %37 = dma.hbm_to_vmem [thread:$0]  %s1, 256, %s32, [#allocation6], 64, 64, 4
    $region9: #{tpu_custom_call.1} parent=1 // pred_fallthru
      _
    // Predicated region
    $region10: #{tpu_custom_call.1} parent=1 // pred_check
      _
    $region11: #{tpu_custom_call.1} parent=1 // pred_check_branch
      %39 = sbr.rel (0) target = $region13
    $region12: #{tpu_custom_call.1} parent=1 // pred_region
      _
    $region13: #{tpu_custom_call.1} parent=1 // pred_fallthru
      _
    // Predicated region
    $region14: #{tpu_custom_call.1} parent=1 // pred_check
      _
    $region15: #{tpu_custom_call.1} parent=1 // pred_check_branch
      %41 = sbr.rel (0) target = $region17
    $region16: #{tpu_custom_call.1} parent=1 // pred_region
      %s43 = ssub.s32 1024, 1024
      %44 = vsyncadd [#allocation6], %s43
      %s45 = sshll.u32 [#allocation7], 4
      %s46 = int_to_ptr.vmem [resolvable:$true] %s45
      %51 = dma.hbm_to_vmem [thread:$0]  %s3, 1024, %s46, [#allocation6], 64, 64, 4
    $region17: #{tpu_custom_call.1} parent=1 // pred_fallthru
      _
    // Predicated region
    $region18: #{tpu_custom_call.1} parent=1 // pred_check
      _
    $region19: #{tpu_custom_call.1} parent=1 // pred_check_branch
      %53 = sbr.rel (0) target = $region21
    $region20: #{tpu_custom_call.1} parent=1 // pred_region
      _
    $region21: #{tpu_custom_call.1} parent=1 // pred_fallthru
      _
    // Predicated region
    $region22: #{tpu_custom_call.1} parent=1 // pred_check
      _
    $region23: #{tpu_custom_call.1} parent=1 // pred_check_branch
      %55 = sbr.rel (0) target = $region25
    $region24: #{tpu_custom_call.1} parent=1 // pred_region
      %s57 = ssub.s32 1024, 1024
      %58 = vsyncadd [#allocation9], %s57
      %s59 = sshll.u32 [#allocation8], 4
      %s60 = int_to_ptr.vmem [resolvable:$true] %s59
      %65 = dma.hbm_to_vmem [thread:$0]  %s5, 1024, %s60, [#allocation9], 64, 64, 4
    $region25: #{tpu_custom_call.1} parent=1 // pred_fallthru
      _
    // Predicated region
    $region26: #{tpu_custom_call.1} parent=1 // pred_check
      _
    $region27: #{tpu_custom_call.1} parent=1 // pred_check_branch
      %67 = sbr.rel (0) target = $region29
    $region28: #{tpu_custom_call.1} parent=1 // pred_region
      _
    $region29: #{tpu_custom_call.1} parent=1 // pred_fallthru
      _
    // Predicated region
    $region30: #{tpu_custom_call.1} parent=1 // pred_check
      _
    $region31: #{tpu_custom_call.1} parent=1 // pred_check_branch
      %69 = sbr.rel (0) target = $region33
    $region32: #{tpu_custom_call.1} parent=1 // pred_region
      %70 = dma.done [#allocation3], 128
    $region33: #{tpu_custom_call.1} parent=1 // pred_fallthru
      _
    // Predicated region
    $region34: #{tpu_custom_call.1} parent=1 // pred_check
      _
    $region35: #{tpu_custom_call.1} parent=1 // pred_check_branch
      %72 = sbr.rel (0) target = $region37
    $region36: #{tpu_custom_call.1} parent=1 // pred_region
      %73 = dma.done [#allocation6], 256
    $region37: #{tpu_custom_call.1} parent=1 // pred_fallthru
      _
    // Predicated region
    $region38: #{tpu_custom_call.1} parent=1 // pred_check
      _
    $region39: #{tpu_custom_call.1} parent=1 // pred_check_branch
      %75 = sbr.rel (0) target = $region41
    $region40: #{tpu_custom_call.1} parent=1 // pred_region
      %76 = dma.done [#allocation6], 1024
    $region41: #{tpu_custom_call.1} parent=1 // pred_fallthru
      _
    // Predicated region
    $region42: #{tpu_custom_call.1} parent=1 // pred_check
      _
    $region43: #{tpu_custom_call.1} parent=1 // pred_check_branch
      %78 = sbr.rel (0) target = $region45
    $region44: #{tpu_custom_call.1} parent=1 // pred_region
      %79 = dma.done [#allocation9], 1024
    $region45: #{tpu_custom_call.1} parent=1 // pred_fallthru
      _
    %v81 = vld [vmem:[%s2] sm:$0x1]
    %v83 = vlaneseq
    %v84 = vshrl.u32 %v83, 7
    %v85 = vsub.s32 0, %v84
    %v86 = vrot.slane %v81, %v85
    %v88 = vld [vmem:[%s6] sm:$0x1]
    %v90 = vlaneseq
    %v91 = vshrl.u32 %v90, 7
    %v92 = vsub.s32 0, %v91
    %v93 = vrot.slane %v88, %v92
    %v95 = vld [vmem:[#allocation2] sm:$0xff]
    %v96 = vpack.c.bf16 %v95, %v95
    %v97 = vld [vmem:[#allocation5] sm:$0xf]
    %v98 = vld [vmem:[#allocation5 + $0x4] sm:$0xf]
    %v99 = vld [vmem:[#allocation5 + $0x8] sm:$0xf]
    %v100 = vld [vmem:[#allocation5 + $0xc] sm:$0xf]
    %v105 = vunpack.c.l.b16 %v97
    %v106 = vunpack.c.l.b16 %v98
    %v107 = vunpack.c.l.b16 %v99
    %v108 = vunpack.c.l.b16 %v100
    %v109 = vpack.c.b16 %v106, %v105
    %v110 = vpack.c.b16 %v108, %v107
    %vm113 = vcmask 261120
    %v115 = vsel %vm113, %v96, 0
    %117 = vmatprep.subr.bf16.mxu0 0
    %118 = vmatpush1.bf16.msra.mxu0 %v109
    %119 = vmatprep.subr.bf16.mxu0 0
    %120 = vmatpush1.bf16.msra.mxu0 %v110
    %121 = vmatprep.subr.bf16.mxu0 0
    %122 = vmatpush1.bf16.msra.mxu0 0
    %123 = vmatprep.subr.bf16.mxu0 0
    %124 = vmatpush1.bf16.msra.mxu0 0
    %125 = vmatprep.subr.bf16.mxu0 0
    %126 = vmatpush1.bf16.msra.mxu0 0
    %127 = vmatprep.subr.bf16.mxu0 0
    %128 = vmatpush1.bf16.msra.mxu0 0
    %129 = vmatprep.subr.bf16.mxu0 0
    %130 = vmatpush1.bf16.msra.mxu0 0
    %131 = vmatprep.subr.bf16.mxu0 0
    %132 = vmatpush1.bf16.msra.mxu0 0
    %133 = vmatprep.subr.bf16.mxu0 0
    %134 = vmatpush1.bf16.msra.mxu0 0
    %135 = vmatprep.subr.bf16.mxu0 0
    %136 = vmatpush1.bf16.msra.mxu0 0
    %137 = vmatprep.subr.bf16.mxu0 0
    %138 = vmatpush1.bf16.msra.mxu0 0
    %139 = vmatprep.subr.bf16.mxu0 0
    %140 = vmatpush1.bf16.msra.mxu0 0
    %141 = vmatprep.subr.bf16.mxu0 0
    %142 = vmatpush1.bf16.msra.mxu0 0
    %143 = vmatprep.subr.bf16.mxu0 0
    %144 = vmatpush1.bf16.msra.mxu0 0
    %145 = vmatprep.subr.bf16.mxu0 0
    %146 = vmatpush1.bf16.msra.mxu0 0
    %147 = vmatprep.subr.bf16.mxu0 0
    %148 = vmatpush1.bf16.msra.mxu0 0
    %149 = vmatprep.mubr.bf16.mxu0 0
    %150 = vmatmul.mubr.bf16.gmra.mrb[0].mxu0 %v115
    %v151 = vpop.f32.mrb[0].mxu0
    %v152 = vadd.f32 %v86, %v151
    %v153 = vpop.f32.mrb[0].mxu0
    %v154 = vpop.f32.mrb[0].mxu0
    %v155 = vpop.f32.mrb[0].mxu0
    %156 = vdwg.mxu0
    %v157 = vmax.f32 %v152, 0.0
    %v158 = vld [vmem:[#allocation7] sm:$0xf]
    %v159 = vld [vmem:[#allocation7 + $0x4] sm:$0xf]
    %v160 = vld [vmem:[#allocation7 + $0x8] sm:$0xf]
    %v161 = vld [vmem:[#allocation7 + $0xc] sm:$0xf]
    %v162 = vld [vmem:[#allocation7 + $0x10] sm:$0xf]
    %v163 = vld [vmem:[#allocation7 + $0x14] sm:$0xf]
    %v164 = vld [vmem:[#allocation7 + $0x18] sm:$0xf]
    %v165 = vld [vmem:[#allocation7 + $0x1c] sm:$0xf]
    %v166 = vld [vmem:[#allocation7 + $0x20] sm:$0xf]
    %v167 = vld [vmem:[#allocation7 + $0x24] sm:$0xf]
    %v168 = vld [vmem:[#allocation7 + $0x28] sm:$0xf]
    %v169 = vld [vmem:[#allocation7 + $0x2c] sm:$0xf]
    %v170 = vld [vmem:[#allocation7 + $0x30] sm:$0xf]
    %v171 = vld [vmem:[#allocation7 + $0x34] sm:$0xf]
    %v172 = vld [vmem:[#allocation7 + $0x38] sm:$0xf]
    %v173 = vld [vmem:[#allocation7 + $0x3c] sm:$0xf]
    %v174 = vld [vmem:[%s4] sm:$0x1]
    %v176 = vlaneseq
    %v177 = vshrl.u32 %v176, 7
    %v178 = vsub.s32 0, %v177
    %v179 = vrot.slane %v174, %v178
    %v181 = vpack.c.bf16 %v157, %v157
    %v198 = vunpack.c.l.b16 %v158
    %v199 = vunpack.c.l.b16 %v159
    %v200 = vunpack.c.l.b16 %v160
    %v201 = vunpack.c.l.b16 %v161
    %v202 = vunpack.c.l.b16 %v162
    %v203 = vunpack.c.l.b16 %v163
    %v204 = vunpack.c.l.b16 %v164
    %v205 = vunpack.c.l.b16 %v165
    %v206 = vunpack.c.l.b16 %v166
    %v207 = vunpack.c.l.b16 %v167
    %v208 = vunpack.c.l.b16 %v168
    %v209 = vunpack.c.l.b16 %v169
    %v210 = vunpack.c.l.b16 %v170
    %v211 = vunpack.c.l.b16 %v171
    %v212 = vunpack.c.l.b16 %v172
    %v213 = vunpack.c.l.b16 %v173
    %v214 = vpack.c.b16 %v199, %v198
    %v215 = vpack.c.b16 %v201, %v200
    %v216 = vpack.c.b16 %v203, %v202
    %v217 = vpack.c.b16 %v205, %v204
    %v218 = vpack.c.b16 %v207, %v206
    %v219 = vpack.c.b16 %v209, %v208
    %v220 = vpack.c.b16 %v211, %v210
    %v221 = vpack.c.b16 %v213, %v212
    %230 = vmatprep.subr.bf16.mxu0 0
    %231 = vmatpush1.bf16.msra.mxu0 %v214
    %232 = vmatprep.subr.bf16.mxu0 0
    %233 = vmatpush1.bf16.msra.mxu0 %v215
    %234 = vmatprep.subr.bf16.mxu0 0
    %235 = vmatpush1.bf16.msra.mxu0 %v216
    %236 = vmatprep.subr.bf16.mxu0 0
    %237 = vmatpush1.bf16.msra.mxu0 %v217
    %238 = vmatprep.subr.bf16.mxu0 0
    %239 = vmatpush1.bf16.msra.mxu0 %v218
    %240 = vmatprep.subr.bf16.mxu0 0
    %241 = vmatpush1.bf16.msra.mxu0 %v219
    %242 = vmatprep.subr.bf16.mxu0 0
    %243 = vmatpush1.bf16.msra.mxu0 %v220
    %244 = vmatprep.subr.bf16.mxu0 0
    %245 = vmatpush1.bf16.msra.mxu0 %v221
    %246 = vmatprep.subr.bf16.mxu0 0
    %247 = vmatpush1.bf16.msra.mxu0 0
    %248 = vmatprep.subr.bf16.mxu0 0
    %249 = vmatpush1.bf16.msra.mxu0 0
    %250 = vmatprep.subr.bf16.mxu0 0
    %251 = vmatpush1.bf16.msra.mxu0 0
    %252 = vmatprep.subr.bf16.mxu0 0
    %253 = vmatpush1.bf16.msra.mxu0 0
    %254 = vmatprep.subr.bf16.mxu0 0
    %255 = vmatpush1.bf16.msra.mxu0 0
    %256 = vmatprep.subr.bf16.mxu0 0
    %257 = vmatpush1.bf16.msra.mxu0 0
    %258 = vmatprep.subr.bf16.mxu0 0
    %259 = vmatpush1.bf16.msra.mxu0 0
    %260 = vmatprep.subr.bf16.mxu0 0
    %261 = vmatpush1.bf16.msra.mxu0 0
    %262 = vmatprep.mubr.bf16.mxu0 0
    %263 = vmatmul.mubr.bf16.gmra.mrb[0].mxu0 %v181
    %v264 = vpop.f32.mrb[0].mxu0
    %v265 = vadd.f32 %v179, %v264
    %v266 = vpop.f32.mrb[0].mxu0
    %v267 = vpop.f32.mrb[0].mxu0
    %v268 = vpop.f32.mrb[0].mxu0
    %269 = vdwg.mxu0
    %v270 = vmax.f32 %v265, 0.0
    %v271 = vpack.c.bf16 %v270, %v270
    %272 = vmatprep.subr.bf16.mxu0 0
    %273 = vmatpush1.bf16.msra.mxu0 %v214
    %274 = vmatprep.subr.bf16.mxu0 0
    %275 = vmatpush1.bf16.msra.mxu0 %v215
    %276 = vmatprep.subr.bf16.mxu0 0
    %277 = vmatpush1.bf16.msra.mxu0 %v216
    %278 = vmatprep.subr.bf16.mxu0 0
    %279 = vmatpush1.bf16.msra.mxu0 %v217
    %280 = vmatprep.subr.bf16.mxu0 0
    %281 = vmatpush1.bf16.msra.mxu0 %v218
    %282 = vmatprep.subr.bf16.mxu0 0
    %283 = vmatpush1.bf16.msra.mxu0 %v219
    %284 = vmatprep.subr.bf16.mxu0 0
    %285 = vmatpush1.bf16.msra.mxu0 %v220
    %286 = vmatprep.subr.bf16.mxu0 0
    %287 = vmatpush1.bf16.msra.mxu0 %v221
    %288 = vmatprep.subr.bf16.mxu0 0
    %289 = vmatpush1.bf16.msra.mxu0 0
    %290 = vmatprep.subr.bf16.mxu0 0
    %291 = vmatpush1.bf16.msra.mxu0 0
    %292 = vmatprep.subr.bf16.mxu0 0
    %293 = vmatpush1.bf16.msra.mxu0 0
    %294 = vmatprep.subr.bf16.mxu0 0
    %295 = vmatpush1.bf16.msra.mxu0 0
    %296 = vmatprep.subr.bf16.mxu0 0
    %297 = vmatpush1.bf16.msra.mxu0 0
    %298 = vmatprep.subr.bf16.mxu0 0
    %299 = vmatpush1.bf16.msra.mxu0 0
    %300 = vmatprep.subr.bf16.mxu0 0
    %301 = vmatpush1.bf16.msra.mxu0 0
    %302 = vmatprep.subr.bf16.mxu0 0
    %303 = vmatpush1.bf16.msra.mxu0 0
    %304 = vmatprep.mubr.bf16.mxu0 0
    %305 = vmatmul.mubr.bf16.gmra.mrb[0].mxu0 %v271
    %v306 = vpop.f32.mrb[0].mxu0
    %v307 = vadd.f32 %v179, %v306
    %v308 = vpop.f32.mrb[0].mxu0
    %v309 = vpop.f32.mrb[0].mxu0
    %v310 = vpop.f32.mrb[0].mxu0
    %311 = vdwg.mxu0
    %v312 = vmax.f32 %v307, 0.0
    %v313 = vpack.c.bf16 %v312, %v312
    %314 = vmatprep.subr.bf16.mxu0 0
    %315 = vmatpush1.bf16.msra.mxu0 %v214
    %316 = vmatprep.subr.bf16.mxu0 0
    %317 = vmatpush1.bf16.msra.mxu0 %v215
    %318 = vmatprep.subr.bf16.mxu0 0
    %319 = vmatpush1.bf16.msra.mxu0 %v216
    %320 = vmatprep.subr.bf16.mxu0 0
    %321 = vmatpush1.bf16.msra.mxu0 %v217
    %322 = vmatprep.subr.bf16.mxu0 0
    %323 = vmatpush1.bf16.msra.mxu0 %v218
    %324 = vmatprep.subr.bf16.mxu0 0
    %325 = vmatpush1.bf16.msra.mxu0 %v219
    %326 = vmatprep.subr.bf16.mxu0 0
    %327 = vmatpush1.bf16.msra.mxu0 %v220
    %328 = vmatprep.subr.bf16.mxu0 0
    %329 = vmatpush1.bf16.msra.mxu0 %v221
    %330 = vmatprep.subr.bf16.mxu0 0
    %331 = vmatpush1.bf16.msra.mxu0 0
    %332 = vmatprep.subr.bf16.mxu0 0
    %333 = vmatpush1.bf16.msra.mxu0 0
    %334 = vmatprep.subr.bf16.mxu0 0
    %335 = vmatpush1.bf16.msra.mxu0 0
    %336 = vmatprep.subr.bf16.mxu0 0
    %337 = vmatpush1.bf16.msra.mxu0 0
    %338 = vmatprep.subr.bf16.mxu0 0
    %339 = vmatpush1.bf16.msra.mxu0 0
    %340 = vmatprep.subr.bf16.mxu0 0
    %341 = vmatpush1.bf16.msra.mxu0 0
    %342 = vmatprep.subr.bf16.mxu0 0
    %343 = vmatpush1.bf16.msra.mxu0 0
    %344 = vmatprep.subr.bf16.mxu0 0
    %345 = vmatpush1.bf16.msra.mxu0 0
    %346 = vmatprep.mubr.bf16.mxu0 0
    %347 = vmatmul.mubr.bf16.gmra.mrb[0].mxu0 %v313
    %v348 = vpop.f32.mrb[0].mxu0
    %v349 = vadd.f32 %v179, %v348
    %v350 = vpop.f32.mrb[0].mxu0
    %v351 = vpop.f32.mrb[0].mxu0
    %v352 = vpop.f32.mrb[0].mxu0
    %353 = vdwg.mxu0
    %v354 = vmax.f32 %v349, 0.0
    %v355 = vpack.c.bf16 %v354, %v354
    %v356 = vld [vmem:[#allocation8] sm:$0xf]
    %v357 = vld [vmem:[#allocation8 + $0x4] sm:$0xf]
    %v358 = vld [vmem:[#allocation8 + $0x8] sm:$0xf]
    %v359 = vld [vmem:[#allocation8 + $0xc] sm:$0xf]
    %v360 = vld [vmem:[#allocation8 + $0x10] sm:$0xf]
    %v361 = vld [vmem:[#allocation8 + $0x14] sm:$0xf]
    %v362 = vld [vmem:[#allocation8 + $0x18] sm:$0xf]
    %v363 = vld [vmem:[#allocation8 + $0x1c] sm:$0xf]
    %v364 = vld [vmem:[#allocation8 + $0x20] sm:$0xf]
    %v365 = vld [vmem:[#allocation8 + $0x24] sm:$0xf]
    %v366 = vld [vmem:[#allocation8 + $0x28] sm:$0xf]
    %v367 = vld [vmem:[#allocation8 + $0x2c] sm:$0xf]
    %v368 = vld [vmem:[#allocation8 + $0x30] sm:$0xf]
    %v369 = vld [vmem:[#allocation8 + $0x34] sm:$0xf]
    %v370 = vld [vmem:[#allocation8 + $0x38] sm:$0xf]
    %v371 = vld [vmem:[#allocation8 + $0x3c] sm:$0xf]
    %v388 = vunpack.c.l.b16 %v356
    %v389 = vunpack.c.l.b16 %v357
    %v390 = vunpack.c.l.b16 %v358
    %v391 = vunpack.c.l.b16 %v359
    %v392 = vunpack.c.l.b16 %v360
    %v393 = vunpack.c.l.b16 %v361
    %v394 = vunpack.c.l.b16 %v362
    %v395 = vunpack.c.l.b16 %v363
    %v396 = vunpack.c.l.b16 %v364
    %v397 = vunpack.c.l.b16 %v365
    %v398 = vunpack.c.l.b16 %v366
    %v399 = vunpack.c.l.b16 %v367
    %v400 = vunpack.c.l.b16 %v368
    %v401 = vunpack.c.l.b16 %v369
    %v402 = vunpack.c.l.b16 %v370
    %v403 = vunpack.c.l.b16 %v371
    %v404 = vpack.c.b16 %v389, %v388
    %v405 = vpack.c.b16 %v391, %v390
    %v406 = vpack.c.b16 %v393, %v392
    %v407 = vpack.c.b16 %v395, %v394
    %v408 = vpack.c.b16 %v397, %v396
    %v409 = vpack.c.b16 %v399, %v398
    %v410 = vpack.c.b16 %v401, %v400
    %v411 = vpack.c.b16 %v403, %v402
    %420 = vmatprep.subr.bf16.mxu0 0
    %421 = vmatpush1.bf16.msra.mxu0 %v404
    %422 = vmatprep.subr.bf16.mxu0 0
    %423 = vmatpush1.bf16.msra.mxu0 %v405
    %424 = vmatprep.subr.bf16.mxu0 0
    %425 = vmatpush1.bf16.msra.mxu0 %v406
    %426 = vmatprep.subr.bf16.mxu0 0
    %427 = vmatpush1.bf16.msra.mxu0 %v407
    %428 = vmatprep.subr.bf16.mxu0 0
    %429 = vmatpush1.bf16.msra.mxu0 %v408
    %430 = vmatprep.subr.bf16.mxu0 0
    %431 = vmatpush1.bf16.msra.mxu0 %v409
    %432 = vmatprep.subr.bf16.mxu0 0
    %433 = vmatpush1.bf16.msra.mxu0 %v410
    %434 = vmatprep.subr.bf16.mxu0 0
    %435 = vmatpush1.bf16.msra.mxu0 %v411
    %436 = vmatprep.subr.bf16.mxu0 0
    %437 = vmatpush1.bf16.msra.mxu0 0
    %438 = vmatprep.subr.bf16.mxu0 0
    %439 = vmatpush1.bf16.msra.mxu0 0
    %440 = vmatprep.subr.bf16.mxu0 0
    %441 = vmatpush1.bf16.msra.mxu0 0
    %442 = vmatprep.subr.bf16.mxu0 0
    %443 = vmatpush1.bf16.msra.mxu0 0
    %444 = vmatprep.subr.bf16.mxu0 0
    %445 = vmatpush1.bf16.msra.mxu0 0
    %446 = vmatprep.subr.bf16.mxu0 0
    %447 = vmatpush1.bf16.msra.mxu0 0
    %448 = vmatprep.subr.bf16.mxu0 0
    %449 = vmatpush1.bf16.msra.mxu0 0
    %450 = vmatprep.subr.bf16.mxu0 0
    %451 = vmatpush1.bf16.msra.mxu0 0
    %452 = vmatprep.mubr.bf16.mxu0 0
    %453 = vmatmul.mubr.bf16.gmra.mrb[0].mxu0 %v355
    %v454 = vpop.f32.mrb[0].mxu0
    %v455 = vadd.f32 %v93, %v454
    %v456 = vpop.f32.mrb[0].mxu0
    %v457 = vpop.f32.mrb[0].mxu0
    %v458 = vpop.f32.mrb[0].mxu0
    %459 = vdwg.mxu0
    %460 = vst [vmem:[#allocation10] sm:$0xff] %v455
    // Predicated region
    $region46: #{tpu_custom_call.1} parent=1 // pred_check
      _
    $region47: #{tpu_custom_call.1} parent=1 // pred_check_branch
      %462 = sbr.rel (0) target = $region49
    $region48: #{tpu_custom_call.1} parent=1 // pred_region
      %s464 = ssub.s32 128, 128
      %465 = vsyncadd [#allocation4], %s464
      %s467 = sshll.u32 [#allocation10], 4
      %s468 = int_to_ptr.vmem [resolvable:$true] %s467
      %470 = dma.vmem_to_hbm [thread:$0]  %s468, 128, %s7, [#allocation4]
    $region49: #{tpu_custom_call.1} parent=1 // pred_fallthru
      _
    // Predicated region
    $region50: #{tpu_custom_call.1} parent=1 // pred_check
      _
    $region51: #{tpu_custom_call.1} parent=1 // pred_check_branch
      %472 = sbr.rel (0) target = $region53
    $region52: #{tpu_custom_call.1} parent=1 // pred_region
      %473 = dma.done [#allocation4], 128
    $region53: #{tpu_custom_call.1} parent=1 // pred_fallthru
      _
    %474 = vsyncpa [#allocation3], 1
    %475 = vsyncpa [#allocation6], 1
    %476 = vsyncpa [#allocation9], 1
    %477 = vsyncpa [#allocation4], 1

</llo_original>
